<compile_context>
chip_gen: v5e
topology: v5e:2x2
jax: 0.10.0
libtpu: 0.0.40
codegen_flags: <defaults>
</compile_context>

<pallas_src>
import functools

import jax
import jax.numpy as jnp
from jax.experimental import pallas as pl
from jax.experimental.pallas import tpu as pltpu


def netff_kernel(n_layers, *refs):
    """Fused forward pass over all layers for one batch tile.

    refs = (x_ref, w0_ref, b0_ref, w1_ref, b1_ref, ..., out_ref)
    x_ref:   (tile_b, Din)      f32
    wl_ref:  (Din_l, Dout_l)    f32   (already transposed: x @ W == torch x @ W.T)
    bl_ref:  (1, Dout_l)        f32
    out_ref: (1, tile_b)        f32   (lane-dense goodness row for this tile)
    """
    x_ref = refs[0]
    out_ref = refs[-1]
    wb_refs = refs[1:-1]

    h = x_ref[...].astype(jnp.float32)
    g_sum = None

    # Static unroll over layers; activations & goodness never leave the chip.
    for l in range(n_layers):
        w_ref = wb_refs[2 * l]
        b_ref = wb_refs[2 * l + 1]

        # F.normalize(h, p=2, dim=1, eps=1e-12):
        #   h / max(||h||, 1e-12) == h * rsqrt(max(||h||^2, 1e-24))  (EUP rsqrt)
        ss = jnp.sum(h * h, axis=1, keepdims=True)
        h_dir = h * jax.lax.rsqrt(jnp.maximum(ss, 1e-24))

        # Linear on the MXU in f32 (kernel is not MXU-bound; keep full accuracy),
        # then bias + ReLU on the VPU.
        z = jnp.dot(h_dir, w_ref[...], preferred_element_type=jnp.float32)
        h = jnp.maximum(z + b_ref[...], 0.0)

        # goodness = ||h||_inf per row; h >= 0 after ReLU so abs is redundant.
        g = jnp.max(h, axis=1, keepdims=True)          # (tile_b, 1)
        g_sum = g if g_sum is None else g_sum + g

    # Lane-dense store: transpose the (tile_b, 1) column to a (1, tile_b) row
    # (rides the otherwise-idle XLU slot); wrapper reshapes back to (B, 1).
    out_ref[...] = g_sum.T.astype(out_ref.dtype)


def netff_forward(x, params, *, tile_b=None):
    """NetFF.forward: sum of per-layer inf-norm goodness, shape (B, 1).

    x: (B, Din) f32.  params: list of (w:(Din_l, Dout_l) f32, b:(Dout_l,) f32).

    tile_b defaults to B (single grid step: best on single-TC v5e/v6e and the
    safe default on v7x).  Pass tile_b=B//2 to try the v7x megacore split.
    """
    B, Din = x.shape
    n_layers = len(params)

    if tile_b is None:
        tile_b = B
    assert B % tile_b == 0, (B, tile_b)
    num_tiles = B // tile_b

    in_specs = [pl.BlockSpec((tile_b, Din), lambda i: (i, 0))]   # batch tile of x
    args = [x]
    for (w, b) in params:
        din, dout = w.shape
        # Constant index_map => weight/bias DMA'd once and stay resident in VMEM.
        in_specs.append(pl.BlockSpec((din, dout), lambda i: (0, 0)))
        in_specs.append(pl.BlockSpec((1, dout), lambda i: (0, 0)))
        args.append(w)
        args.append(b.reshape(1, dout))

    kernel = functools.partial(netff_kernel, n_layers)

    out = pl.pallas_call(
        kernel,
        # Lane-dense output slab: (num_tiles, tile_b), batch on the lane axis.
        out_shape=jax.ShapeDtypeStruct((num_tiles, tile_b), jnp.float32),
        grid_spec=pltpu.PrefetchScalarGridSpec(
            num_scalar_prefetch=0,
            grid=(num_tiles,),
            in_specs=in_specs,
            out_specs=pl.BlockSpec((1, tile_b), lambda i: (i, 0)),
        ),
        compiler_params=pltpu.CompilerParams(
            # Batch tiles are independent; with num_tiles==1 this is moot,
            # with >1 it allows megacore sharding on v7x.
            dimension_semantics=(
                ("parallel",) if num_tiles > 1 else ("arbitrary",)
            ),
            # Conservative explicit budget (actual footprint well under 1 MiB
            # at these shapes); safe on v5e/v6e/v7x.
            vmem_limit_bytes=32 * 1024 * 1024,
        ),
    )(*args)
    return out.reshape(B, 1)


def netff_ref(x, params):
    """Pure-JAX f32 reference mirroring the PyTorch module."""
    total = jnp.zeros((x.shape[0],), jnp.float32)
    h = x
    for w, b in params:
        n = jnp.sqrt(jnp.sum(h * h, axis=1, keepdims=True))
        hd = h / jnp.maximum(n, 1e-12)
        h = jnp.maximum(hd @ w + b, 0.0)
        total = total + jnp.max(jnp.abs(h), axis=1)
    return total[:, None]


def init_params(key, input_dim, hidden_dim, n_layers):
    """Deterministic init mimicking torch.nn.Linear default (U(+/- 1/sqrt(fan_in)))."""
    params = []
    for i in range(n_layers):
        fan_in = input_dim if i == 0 else hidden_dim
        key, kw, kb = jax.random.split(key, 3)
        bound = 1.0 / jnp.sqrt(fan_in)
        w = jax.random.uniform(kw, (fan_in, hidden_dim), jnp.float32, -bound, bound)
        b = jax.random.uniform(kb, (hidden_dim,), jnp.float32, -bound, bound)
        params.append((w, b))
    return params


if __name__ == "__main__":
    # Small MLP shapes consistent with the module: (batch, input_dim) input.
    # Single grid step (tile_b = B) per the review for single-TC chips.
    B, INPUT_DIM, HIDDEN_DIM, N_LAYERS = 8, 32, 64, 4

    key = jax.random.PRNGKey(0)
    key, kx = jax.random.split(key)
    x = jax.random.normal(kx, (B, INPUT_DIM), jnp.float32)
    params = init_params(key, INPUT_DIM, HIDDEN_DIM, N_LAYERS)

    out = jax.block_until_ready(netff_forward(x, params))
    ref = jax.block_until_ready(netff_ref(x, params))

    assert out.shape == (B, 1), out.shape
    # f32 MXU path -> tight agreement with the f32 reference.
    assert jnp.allclose(out, ref, rtol=1e-4, atol=1e-4), (out, ref)
    print("KERNEL_OK")
</pallas_src>

<mosaic_0001>
module attributes {stable_mosaic.version = 11 : i64} {
  func.func @netff_kernel(%arg0: i32, %arg1: memref<8x32xf32, #tpu.memory_space<vmem>>, %arg2: memref<32x64xf32, #tpu.memory_space<vmem>>, %arg3: memref<1x64xf32, #tpu.memory_space<vmem>>, %arg4: memref<64x64xf32, #tpu.memory_space<vmem>>, %arg5: memref<1x64xf32, #tpu.memory_space<vmem>>, %arg6: memref<64x64xf32, #tpu.memory_space<vmem>>, %arg7: memref<1x64xf32, #tpu.memory_space<vmem>>, %arg8: memref<64x64xf32, #tpu.memory_space<vmem>>, %arg9: memref<1x64xf32, #tpu.memory_space<vmem>>, %arg10: memref<1x8xf32, #tpu.memory_space<vmem>>) attributes {dimension_semantics = [#tpu.dimension_semantics<arbitrary>], iteration_bounds = array<i64: 1>, scalar_prefetch = 0 : i64, scratch_operands = 0 : i64, tpu.core_type = #tpu.core_type<tc>, window_params = [{transform_indices = @transform_0, window_bounds = array<i64: 8, 32>}, {pipeline_mode = #tpu.pipeline_mode<synchronous>, transform_indices = @transform_1, window_bounds = array<i64: 32, 64>}, {pipeline_mode = #tpu.pipeline_mode<synchronous>, transform_indices = @transform_2, window_bounds = array<i64: 1, 64>}, {pipeline_mode = #tpu.pipeline_mode<synchronous>, transform_indices = @transform_3, window_bounds = array<i64: 64, 64>}, {pipeline_mode = #tpu.pipeline_mode<synchronous>, transform_indices = @transform_4, window_bounds = array<i64: 1, 64>}, {pipeline_mode = #tpu.pipeline_mode<synchronous>, transform_indices = @transform_5, window_bounds = array<i64: 64, 64>}, {pipeline_mode = #tpu.pipeline_mode<synchronous>, transform_indices = @transform_6, window_bounds = array<i64: 1, 64>}, {pipeline_mode = #tpu.pipeline_mode<synchronous>, transform_indices = @transform_7, window_bounds = array<i64: 64, 64>}, {pipeline_mode = #tpu.pipeline_mode<synchronous>, transform_indices = @transform_8, window_bounds = array<i64: 1, 64>}, {transform_indices = @transform_9, window_bounds = array<i64: 1, 8>}]} {
    %c0 = arith.constant 0 : index
    %c0_0 = arith.constant 0 : index
    %0 = vector.load %arg1[%c0, %c0_0] : memref<8x32xf32, #tpu.memory_space<vmem>>, vector<8x32xf32>
    %1 = arith.mulf %0, %0 : vector<8x32xf32>
    %cst = arith.constant dense<0.000000e+00> : vector<8xf32>
    %2 = vector.multi_reduction <add>, %1, %cst [1] : vector<8x32xf32> to vector<8xf32>
    %3 = vector.shape_cast %2 : vector<8xf32> to vector<8x1xf32>
    %cst_1 = arith.constant 1.000000e-24 : f32
    %4 = vector.broadcast %cst_1 : f32 to vector<8x1xf32>
    %5 = arith.maximumf %3, %4 : vector<8x1xf32>
    %6 = math.rsqrt %5 : vector<8x1xf32>
    %7 = vector.broadcast %6 : vector<8x1xf32> to vector<8x32xf32>
    %8 = arith.mulf %0, %7 : vector<8x32xf32>
    %c0_2 = arith.constant 0 : index
    %c0_3 = arith.constant 0 : index
    %9 = vector.load %arg2[%c0_2, %c0_3] : memref<32x64xf32, #tpu.memory_space<vmem>>, vector<32x64xf32>
    %cst_4 = arith.constant dense<0.000000e+00> : vector<8x64xf32>
    %10 = tpu.matmul %8, %9, %cst_4 {dimension_numbers = #tpu.dot_dimension_numbers<[1], [0], [0], [1], [0, 0, 1, 1], [], []>} : vector<8x32xf32>, vector<32x64xf32>, vector<8x64xf32> -> vector<8x64xf32>
    %c0_5 = arith.constant 0 : index
    %c0_6 = arith.constant 0 : index
    %11 = vector.load %arg3[%c0_5, %c0_6] : memref<1x64xf32, #tpu.memory_space<vmem>>, vector<1x64xf32>
    %12 = vector.broadcast %11 : vector<1x64xf32> to vector<8x64xf32>
    %13 = arith.addf %10, %12 : vector<8x64xf32>
    %cst_7 = arith.constant 0.000000e+00 : f32
    %14 = vector.broadcast %cst_7 : f32 to vector<8x64xf32>
    %15 = arith.maximumf %13, %14 : vector<8x64xf32>
    %cst_8 = arith.constant dense<0xFF800000> : vector<8xf32>
    %16 = vector.multi_reduction <maximumf>, %15, %cst_8 [1] : vector<8x64xf32> to vector<8xf32>
    %17 = vector.shape_cast %16 : vector<8xf32> to vector<8x1xf32>
    %18 = arith.mulf %15, %15 : vector<8x64xf32>
    %cst_9 = arith.constant dense<0.000000e+00> : vector<8xf32>
    %19 = vector.multi_reduction <add>, %18, %cst_9 [1] : vector<8x64xf32> to vector<8xf32>
    %20 = vector.shape_cast %19 : vector<8xf32> to vector<8x1xf32>
    %cst_10 = arith.constant 1.000000e-24 : f32
    %21 = vector.broadcast %cst_10 : f32 to vector<8x1xf32>
    %22 = arith.maximumf %20, %21 : vector<8x1xf32>
    %23 = math.rsqrt %22 : vector<8x1xf32>
    %24 = vector.broadcast %23 : vector<8x1xf32> to vector<8x64xf32>
    %25 = arith.mulf %15, %24 : vector<8x64xf32>
    %c0_11 = arith.constant 0 : index
    %c0_12 = arith.constant 0 : index
    %26 = vector.load %arg4[%c0_11, %c0_12] : memref<64x64xf32, #tpu.memory_space<vmem>>, vector<64x64xf32>
    %cst_13 = arith.constant dense<0.000000e+00> : vector<8x64xf32>
    %27 = tpu.matmul %25, %26, %cst_13 {dimension_numbers = #tpu.dot_dimension_numbers<[1], [0], [0], [1], [0, 0, 1, 1], [], []>} : vector<8x64xf32>, vector<64x64xf32>, vector<8x64xf32> -> vector<8x64xf32>
    %c0_14 = arith.constant 0 : index
    %c0_15 = arith.constant 0 : index
    %28 = vector.load %arg5[%c0_14, %c0_15] : memref<1x64xf32, #tpu.memory_space<vmem>>, vector<1x64xf32>
    %29 = vector.broadcast %28 : vector<1x64xf32> to vector<8x64xf32>
    %30 = arith.addf %27, %29 : vector<8x64xf32>
    %cst_16 = arith.constant 0.000000e+00 : f32
    %31 = vector.broadcast %cst_16 : f32 to vector<8x64xf32>
    %32 = arith.maximumf %30, %31 : vector<8x64xf32>
    %cst_17 = arith.constant dense<0xFF800000> : vector<8xf32>
    %33 = vector.multi_reduction <maximumf>, %32, %cst_17 [1] : vector<8x64xf32> to vector<8xf32>
    %34 = vector.shape_cast %33 : vector<8xf32> to vector<8x1xf32>
    %35 = arith.addf %17, %34 : vector<8x1xf32>
    %36 = arith.mulf %32, %32 : vector<8x64xf32>
    %cst_18 = arith.constant dense<0.000000e+00> : vector<8xf32>
    %37 = vector.multi_reduction <add>, %36, %cst_18 [1] : vector<8x64xf32> to vector<8xf32>
    %38 = vector.shape_cast %37 : vector<8xf32> to vector<8x1xf32>
    %cst_19 = arith.constant 1.000000e-24 : f32
    %39 = vector.broadcast %cst_19 : f32 to vector<8x1xf32>
    %40 = arith.maximumf %38, %39 : vector<8x1xf32>
    %41 = math.rsqrt %40 : vector<8x1xf32>
    %42 = vector.broadcast %41 : vector<8x1xf32> to vector<8x64xf32>
    %43 = arith.mulf %32, %42 : vector<8x64xf32>
    %c0_20 = arith.constant 0 : index
    %c0_21 = arith.constant 0 : index
    %44 = vector.load %arg6[%c0_20, %c0_21] : memref<64x64xf32, #tpu.memory_space<vmem>>, vector<64x64xf32>
    %cst_22 = arith.constant dense<0.000000e+00> : vector<8x64xf32>
    %45 = tpu.matmul %43, %44, %cst_22 {dimension_numbers = #tpu.dot_dimension_numbers<[1], [0], [0], [1], [0, 0, 1, 1], [], []>} : vector<8x64xf32>, vector<64x64xf32>, vector<8x64xf32> -> vector<8x64xf32>
    %c0_23 = arith.constant 0 : index
    %c0_24 = arith.constant 0 : index
    %46 = vector.load %arg7[%c0_23, %c0_24] : memref<1x64xf32, #tpu.memory_space<vmem>>, vector<1x64xf32>
    %47 = vector.broadcast %46 : vector<1x64xf32> to vector<8x64xf32>
    %48 = arith.addf %45, %47 : vector<8x64xf32>
    %cst_25 = arith.constant 0.000000e+00 : f32
    %49 = vector.broadcast %cst_25 : f32 to vector<8x64xf32>
    %50 = arith.maximumf %48, %49 : vector<8x64xf32>
    %cst_26 = arith.constant dense<0xFF800000> : vector<8xf32>
    %51 = vector.multi_reduction <maximumf>, %50, %cst_26 [1] : vector<8x64xf32> to vector<8xf32>
    %52 = vector.shape_cast %51 : vector<8xf32> to vector<8x1xf32>
    %53 = arith.addf %35, %52 : vector<8x1xf32>
    %54 = arith.mulf %50, %50 : vector<8x64xf32>
    %cst_27 = arith.constant dense<0.000000e+00> : vector<8xf32>
    %55 = vector.multi_reduction <add>, %54, %cst_27 [1] : vector<8x64xf32> to vector<8xf32>
    %56 = vector.shape_cast %55 : vector<8xf32> to vector<8x1xf32>
    %cst_28 = arith.constant 1.000000e-24 : f32
    %57 = vector.broadcast %cst_28 : f32 to vector<8x1xf32>
    %58 = arith.maximumf %56, %57 : vector<8x1xf32>
    %59 = math.rsqrt %58 : vector<8x1xf32>
    %60 = vector.broadcast %59 : vector<8x1xf32> to vector<8x64xf32>
    %61 = arith.mulf %50, %60 : vector<8x64xf32>
    %c0_29 = arith.constant 0 : index
    %c0_30 = arith.constant 0 : index
    %62 = vector.load %arg8[%c0_29, %c0_30] : memref<64x64xf32, #tpu.memory_space<vmem>>, vector<64x64xf32>
    %cst_31 = arith.constant dense<0.000000e+00> : vector<8x64xf32>
    %63 = tpu.matmul %61, %62, %cst_31 {dimension_numbers = #tpu.dot_dimension_numbers<[1], [0], [0], [1], [0, 0, 1, 1], [], []>} : vector<8x64xf32>, vector<64x64xf32>, vector<8x64xf32> -> vector<8x64xf32>
    %c0_32 = arith.constant 0 : index
    %c0_33 = arith.constant 0 : index
    %64 = vector.load %arg9[%c0_32, %c0_33] : memref<1x64xf32, #tpu.memory_space<vmem>>, vector<1x64xf32>
    %65 = vector.broadcast %64 : vector<1x64xf32> to vector<8x64xf32>
    %66 = arith.addf %63, %65 : vector<8x64xf32>
    %cst_34 = arith.constant 0.000000e+00 : f32
    %67 = vector.broadcast %cst_34 : f32 to vector<8x64xf32>
    %68 = arith.maximumf %66, %67 : vector<8x64xf32>
    %cst_35 = arith.constant dense<0xFF800000> : vector<8xf32>
    %69 = vector.multi_reduction <maximumf>, %68, %cst_35 [1] : vector<8x64xf32> to vector<8xf32>
    %70 = vector.shape_cast %69 : vector<8xf32> to vector<8x1xf32>
    %71 = arith.addf %53, %70 : vector<8x1xf32>
    %72 = tpu.transpose %71, [1, 0] : vector<8x1xf32> -> vector<1x8xf32>
    %c0_36 = arith.constant 0 : index
    %c0_37 = arith.constant 0 : index
    %73 = vector.load %arg10[%c0_36, %c0_37] : memref<1x8xf32, #tpu.memory_space<vmem>>, vector<1x8xf32>
    tpu.vector_store %arg10[%c0_36, %c0_37], %72 {strides = array<i32>} : memref<1x8xf32, #tpu.memory_space<vmem>>, vector<1x8xf32>,
    return
  }
  func.func @transform_0(%arg0: i32) -> (i32, i32) {
    %c0_i32 = arith.constant 0 : i32
    %c0_i32_0 = arith.constant 0 : i32
    return %arg0, %c0_i32 : i32, i32
  }
  func.func @transform_1(%arg0: i32) -> (i32, i32) {
    %c0_i32 = arith.constant 0 : i32
    %c0_i32_0 = arith.constant 0 : i32
    %c0_i32_1 = arith.constant 0 : i32
    return %c0_i32, %c0_i32_0 : i32, i32
  }
  func.func @transform_2(%arg0: i32) -> (i32, i32) {
    %c0_i32 = arith.constant 0 : i32
    %c0_i32_0 = arith.constant 0 : i32
    %c0_i32_1 = arith.constant 0 : i32
    return %c0_i32, %c0_i32_0 : i32, i32
  }
  func.func @transform_3(%arg0: i32) -> (i32, i32) {
    %c0_i32 = arith.constant 0 : i32
    %c0_i32_0 = arith.constant 0 : i32
    %c0_i32_1 = arith.constant 0 : i32
    return %c0_i32, %c0_i32_0 : i32, i32
  }
  func.func @transform_4(%arg0: i32) -> (i32, i32) {
    %c0_i32 = arith.constant 0 : i32
    %c0_i32_0 = arith.constant 0 : i32
    %c0_i32_1 = arith.constant 0 : i32
    return %c0_i32, %c0_i32_0 : i32, i32
  }
  func.func @transform_5(%arg0: i32) -> (i32, i32) {
    %c0_i32 = arith.constant 0 : i32
    %c0_i32_0 = arith.constant 0 : i32
    %c0_i32_1 = arith.constant 0 : i32
    return %c0_i32, %c0_i32_0 : i32, i32
  }
  func.func @transform_6(%arg0: i32) -> (i32, i32) {
    %c0_i32 = arith.constant 0 : i32
    %c0_i32_0 = arith.constant 0 : i32
    %c0_i32_1 = arith.constant 0 : i32
    return %c0_i32, %c0_i32_0 : i32, i32
  }
  func.func @transform_7(%arg0: i32) -> (i32, i32) {
    %c0_i32 = arith.constant 0 : i32
    %c0_i32_0 = arith.constant 0 : i32
    %c0_i32_1 = arith.constant 0 : i32
    return %c0_i32, %c0_i32_0 : i32, i32
  }
  func.func @transform_8(%arg0: i32) -> (i32, i32) {
    %c0_i32 = arith.constant 0 : i32
    %c0_i32_0 = arith.constant 0 : i32
    %c0_i32_1 = arith.constant 0 : i32
    return %c0_i32, %c0_i32_0 : i32, i32
  }
  func.func @transform_9(%arg0: i32) -> (i32, i32) {
    %c0_i32 = arith.constant 0 : i32
    %c0_i32_0 = arith.constant 0 : i32
    return %arg0, %c0_i32 : i32, i32
  }
}

</mosaic_0001>

<llo_original>
// kernel: tpu_custom_call.1
$region0: #{tpu_custom_call.1}
  #allocation0 [shape = 'u32[]', space=smem, size = 0x4, offset = 0x4, fixed_abs, tag = 'smem constant byte address 0x4 - core index']
  #allocation1 [shape = 'u32[72,128]{1,0:T(1,128)}', space=vmem, size = 0x9000, scoped, tag = 'internal scratch']
  %s0 = inlined_call_operand.hbm [shape: f32[8,32], index: 0, kind: input, shape index: {}]
  %s1 = inlined_call_operand.hbm [shape: f32[32,64], index: 1, kind: input, shape index: {}]
  %s2 = inlined_call_operand.vmem [shape: f32[1,64], index: 2, kind: input, shape index: {}]
  %s3 = inlined_call_operand.hbm [shape: f32[64,64], index: 3, kind: input, shape index: {}]
  %s4 = inlined_call_operand.vmem [shape: f32[1,64], index: 4, kind: input, shape index: {}]
  %s5 = inlined_call_operand.hbm [shape: f32[64,64], index: 5, kind: input, shape index: {}]
  %s6 = inlined_call_operand.vmem [shape: f32[1,64], index: 6, kind: input, shape index: {}]
  %s7 = inlined_call_operand.hbm [shape: f32[64,64], index: 7, kind: input, shape index: {}]
  %s8 = inlined_call_operand.vmem [shape: f32[1,64], index: 8, kind: input, shape index: {}]
  %s9 = inlined_call_operand.hbm [shape: f32[1,8], index: 9, kind: output, shape index: {}]
  %s10 = sld [smem:[#allocation0]]
  $region66: #{tpu_custom_call.1} parent=0
    _
  %s12 = ssub.s32 1, %s10
  %s13 = scalar_select 0, %s12, %s10
  $region1: #{tpu_custom_call.1} parent=0
    #allocation2 [shape = 'u8[4096]{0}', space=vmem, size = 0x1000, scoped, tag = 'input window, operand 0, single buffered']
    #allocation3 [shape = 's32[1]{0}', space=sflag, size = 0x4, scoped, tag = 'scoped memory for tpu_custom_call.1']
    #allocation4 [shape = 's32[1]{0}', space=sflag, size = 0x4, scoped, tag = 'scoped memory for tpu_custom_call.1']
    #allocation5 [shape = 'u8[16384]{0}', space=vmem, size = 0x4000, scoped, tag = 'input window, operand 1, single buffered']
    #allocation6 [shape = 's32[1]{0}', space=sflag, size = 0x4, scoped, tag = 'scoped memory for tpu_custom_call.1']
    #allocation7 [shape = 'u8[32768]{0}', space=vmem, size = 0x8000, scoped, tag = 'input window, operand 3, single buffered']
    #allocation8 [shape = 'u8[32768]{0}', space=vmem, size = 0x8000, scoped, tag = 'input window, operand 5, single buffered']
    #allocation9 [shape = 's32[1]{0}', space=sflag, size = 0x4, scoped, tag = 'scoped memory for tpu_custom_call.1']
    #allocation10 [shape = 'u8[32768]{0}', space=vmem, size = 0x8000, scoped, tag = 'input window, operand 7, single buffered']
    #allocation11 [shape = 'u8[512]{0}', space=vmem, size = 0x400, scoped, tag = 'output window, operand 0, single buffered']
    %14 = vsyncpa [#allocation3], 0
    %15 = vsyncpa [#allocation6], 0
    %16 = vsyncpa [#allocation9], 0
    %17 = vsyncpa [#allocation4], 0
    // Predicated region
    $region2: #{tpu_custom_call.1} parent=1 // pred_check
      _
    $region3: #{tpu_custom_call.1} parent=1 // pred_check_branch
      %19 = sbr.rel (0) target = $region5
    $region4: #{tpu_custom_call.1} parent=1 // pred_region
      %21 = vsyncadd [#allocation3], 0
      %s23 = sshll.u32 %s0, 4
      %s24 = int_to_ptr.hbm [resolvable:$true] %s23
      %s25 = sshll.u32 [#allocation2], 4
      %s26 = int_to_ptr.vmem [resolvable:$true] %s25
      %28 = dma.hbm_to_vmem [thread:$0]  %s24, 128, %s26, [#allocation3]
    $region5: #{tpu_custom_call.1} parent=1 // pred_fallthru
      _
    // Predicated region
    $region6: #{tpu_custom_call.1} parent=1 // pred_check
      _
    $region7: #{tpu_custom_call.1} parent=1 // pred_check_branch
      %30 = sbr.rel (0) target = $region9
    $region8: #{tpu_custom_call.1} parent=1 // pred_region
      %32 = vsyncadd [#allocation6], 0
      %s33 = sshll.u32 %s1, 4
      %s34 = int_to_ptr.hbm [resolvable:$true] %s33
      %s35 = sshll.u32 [#allocation5], 4
      %s36 = int_to_ptr.vmem [resolvable:$true] %s35
      %41 = dma.hbm_to_vmem [thread:$0]  %s34, 512, %s36, [#allocation6], 128, 128, 8
    $region9: #{tpu_custom_call.1} parent=1 // pred_fallthru
      _
    // Predicated region
    $region10: #{tpu_custom_call.1} parent=1 // pred_check
      _
    $region11: #{tpu_custom_call.1} parent=1 // pred_check_branch
      %43 = sbr.rel (0) target = $region13
    $region12: #{tpu_custom_call.1} parent=1 // pred_region
      _
    $region13: #{tpu_custom_call.1} parent=1 // pred_fallthru
      _
    // Predicated region
    $region14: #{tpu_custom_call.1} parent=1 // pred_check
      _
    $region15: #{tpu_custom_call.1} parent=1 // pred_check_branch
      %45 = sbr.rel (0) target = $region17
    $region16: #{tpu_custom_call.1} parent=1 // pred_region
      %47 = vsyncadd [#allocation6], 0
      %s48 = sshll.u32 %s3, 4
      %s49 = int_to_ptr.hbm [resolvable:$true] %s48
      %s50 = sshll.u32 [#allocation7], 4
      %s51 = int_to_ptr.vmem [resolvable:$true] %s50
      %56 = dma.hbm_to_vmem [thread:$0]  %s49, 1024, %s51, [#allocation6], 128, 128, 8
    $region17: #{tpu_custom_call.1} parent=1 // pred_fallthru
      _
    // Predicated region
    $region18: #{tpu_custom_call.1} parent=1 // pred_check
      _
    $region19: #{tpu_custom_call.1} parent=1 // pred_check_branch
      %58 = sbr.rel (0) target = $region21
    $region20: #{tpu_custom_call.1} parent=1 // pred_region
      _
    $region21: #{tpu_custom_call.1} parent=1 // pred_fallthru
      _
    // Predicated region
    $region22: #{tpu_custom_call.1} parent=1 // pred_check
      _
    $region23: #{tpu_custom_call.1} parent=1 // pred_check_branch
      %60 = sbr.rel (0) target = $region25
    $region24: #{tpu_custom_call.1} parent=1 // pred_region
      %62 = vsyncadd [#allocation9], 0
      %s63 = sshll.u32 %s5, 4
      %s64 = int_to_ptr.hbm [resolvable:$true] %s63
      %s65 = sshll.u32 [#allocation8], 4
      %s66 = int_to_ptr.vmem [resolvable:$true] %s65
      %71 = dma.hbm_to_vmem [thread:$0]  %s64, 1024, %s66, [#allocation9], 128, 128, 8
    $region25: #{tpu_custom_call.1} parent=1 // pred_fallthru
      _
    // Predicated region
    $region26: #{tpu_custom_call.1} parent=1 // pred_check
      _
    $region27: #{tpu_custom_call.1} parent=1 // pred_check_branch
      %73 = sbr.rel (0) target = $region29
    $region28: #{tpu_custom_call.1} parent=1 // pred_region
      _
    $region29: #{tpu_custom_call.1} parent=1 // pred_fallthru
      _
    // Predicated region
    $region30: #{tpu_custom_call.1} parent=1 // pred_check
      _
    $region31: #{tpu_custom_call.1} parent=1 // pred_check_branch
      %75 = sbr.rel (0) target = $region33
    $region32: #{tpu_custom_call.1} parent=1 // pred_region
      %77 = vsyncadd [#allocation9], 0
      %s78 = sshll.u32 %s7, 4
      %s79 = int_to_ptr.hbm [resolvable:$true] %s78
      %s80 = sshll.u32 [#allocation10], 4
      %s81 = int_to_ptr.vmem [resolvable:$true] %s80
      %86 = dma.hbm_to_vmem [thread:$0]  %s79, 1024, %s81, [#allocation9], 128, 128, 8
    $region33: #{tpu_custom_call.1} parent=1 // pred_fallthru
      _
    // Predicated region
    $region34: #{tpu_custom_call.1} parent=1 // pred_check
      _
    $region35: #{tpu_custom_call.1} parent=1 // pred_check_branch
      %88 = sbr.rel (0) target = $region37
    $region36: #{tpu_custom_call.1} parent=1 // pred_region
      _
    $region37: #{tpu_custom_call.1} parent=1 // pred_fallthru
      _
    // Predicated region
    $region38: #{tpu_custom_call.1} parent=1 // pred_check
      _
    $region39: #{tpu_custom_call.1} parent=1 // pred_check_branch
      %90 = sbr.rel (0) target = $region41
    $region40: #{tpu_custom_call.1} parent=1 // pred_region
      %92 = dma.done [#allocation3], 128
    $region41: #{tpu_custom_call.1} parent=1 // pred_fallthru
      _
    // Predicated region
    $region42: #{tpu_custom_call.1} parent=1 // pred_check
      _
    $region43: #{tpu_custom_call.1} parent=1 // pred_check_branch
      %94 = sbr.rel (0) target = $region45
    $region44: #{tpu_custom_call.1} parent=1 // pred_region
      %96 = dma.done [#allocation6], 512
    $region45: #{tpu_custom_call.1} parent=1 // pred_fallthru
      _
    // Predicated region
    $region46: #{tpu_custom_call.1} parent=1 // pred_check
      _
    $region47: #{tpu_custom_call.1} parent=1 // pred_check_branch
      %98 = sbr.rel (0) target = $region49
    $region48: #{tpu_custom_call.1} parent=1 // pred_region
      %100 = dma.done [#allocation6], 1024
    $region49: #{tpu_custom_call.1} parent=1 // pred_fallthru
      _
    // Predicated region
    $region50: #{tpu_custom_call.1} parent=1 // pred_check
      _
    $region51: #{tpu_custom_call.1} parent=1 // pred_check_branch
      %102 = sbr.rel (0) target = $region53
    $region52: #{tpu_custom_call.1} parent=1 // pred_region
      %104 = dma.done [#allocation9], 1024
    $region53: #{tpu_custom_call.1} parent=1 // pred_fallthru
      _
    // Predicated region
    $region54: #{tpu_custom_call.1} parent=1 // pred_check
      _
    $region55: #{tpu_custom_call.1} parent=1 // pred_check_branch
      %106 = sbr.rel (0) target = $region57
    $region56: #{tpu_custom_call.1} parent=1 // pred_region
      %108 = dma.done [#allocation9], 1024
    $region57: #{tpu_custom_call.1} parent=1 // pred_fallthru
      _
    %v109 = vld [vmem:[#allocation2] sm:$0xff]
    %v110 = vmul.f32 %v109, %v109
    %vm111 = vcmask 261120
    %v112 = vsel %vm111, %v110, 0.0
    %113 = vadd.xlane.f32.xlu0 %v112
    %v114 = vpop.xlane.xlu0 %113
    %v115 = vmax.f32 %v114, 1e-24
    %v116 = vrsqrt.pop %v115
    %v117 = vmul.f32 %v116, %v115
    %v118 = vmul.f32 %v117, %v116
    %v119 = vmul.f32 0.5, %v118
    %v120 = vsub.f32 1.5, %v119
    %v121 = vmul.f32 %v116, %v120
    %vm122 = vweird.f32 %v115
    %vm123 = vweird.f32 %v116
    %vm124 = vmor %vm122, %vm123
    %v125 = vsel %vm124, %v116, %v121
    %v126 = vmul.f32 %v109, %v125
    %v127 = vld [vmem:[#allocation5] sm:$0xff]
    %v128 = vld [vmem:[#allocation5 + $0x8] sm:$0xff]
    %v129 = vld [vmem:[#allocation5 + $0x10] sm:$0xff]
    %v130 = vld [vmem:[#allocation5 + $0x18] sm:$0xff]
    %v131 = vld [vmem:[%s2] sm:$0x1]
    %v133 = vperm.slane %v131, 0
    %v136 = vsel %vm111, %v126, 0
    %138 = vmatpush.msra.mxu0 0.0
    %139 = vmatpush.msra.mxu0 0.0
    %140 = vmatpush.msra.mxu0 0.0
    %141 = vmatpush.msra.mxu0 0.0
    %142 = vmatpush.msra.mxu0 0.0
    %143 = vmatpush.msra.mxu0 0.0
    %144 = vmatpush.msra.mxu0 0.0
    %145 = vmatpush.msra.mxu0 0.0
    %146 = vmatpush.msra.mxu0 0.0
    %147 = vmatpush.msra.mxu0 0.0
    %148 = vmatpush.msra.mxu0 0.0
    %149 = vmatpush.msra.mxu0 0.0
    %150 = vmatpush.msra.mxu0 %v130
    %151 = vmatpush.msra.mxu0 %v129
    %152 = vmatpush.msra.mxu0 %v128
    %153 = vmatpush.msra.mxu0 %v127
    %154 = vmatmul.f32.gmra.mxu0 %v136
    %v155 = vpop.f32.mrf.mxu0
    %v156 = vadd.f32 %v133, %v155
    %157 = vdwg.mxu0
    %v158 = vmax.f32 %v156, 0.0
    %vm159 = vcmask 523264
    %v160 = vsel %vm159, %v158, -inf
    %161 = vmax.xlane.f32.xlu0 %v160
    %v162 = vpop.xlane.xlu0 %161
    %v163 = vmul.f32 %v158, %v158
    %v164 = vsel %vm159, %v163, 0.0
    %165 = vadd.xlane.f32.xlu0 %v164
    %v166 = vpop.xlane.xlu0 %165
    %v167 = vmax.f32 %v166, 1e-24
    %v168 = vrsqrt.pop %v167
    %v169 = vmul.f32 %v168, %v167
    %v170 = vmul.f32 %v169, %v168
    %v171 = vmul.f32 0.5, %v170
    %v172 = vsub.f32 1.5, %v171
    %v173 = vmul.f32 %v168, %v172
    %vm174 = vweird.f32 %v167
    %vm175 = vweird.f32 %v168
    %vm176 = vmor %vm174, %vm175
    %v177 = vsel %vm176, %v168, %v173
    %v178 = vmul.f32 %v158, %v177
    %v179 = vld [vmem:[#allocation7] sm:$0xff]
    %v180 = vld [vmem:[#allocation7 + $0x8] sm:$0xff]
    %v181 = vld [vmem:[#allocation7 + $0x10] sm:$0xff]
    %v182 = vld [vmem:[#allocation7 + $0x18] sm:$0xff]
    %v183 = vld [vmem:[#allocation7 + $0x20] sm:$0xff]
    %v184 = vld [vmem:[#allocation7 + $0x28] sm:$0xff]
    %v185 = vld [vmem:[#allocation7 + $0x30] sm:$0xff]
    %v186 = vld [vmem:[#allocation7 + $0x38] sm:$0xff]
    %v187 = vld [vmem:[%s4] sm:$0x1]
    %v189 = vperm.slane %v187, 0
    %v192 = vsel %vm159, %v178, 0
    %194 = vmatpush.msra.mxu0 0.0
    %195 = vmatpush.msra.mxu0 0.0
    %196 = vmatpush.msra.mxu0 0.0
    %197 = vmatpush.msra.mxu0 0.0
    %198 = vmatpush.msra.mxu0 0.0
    %199 = vmatpush.msra.mxu0 0.0
    %200 = vmatpush.msra.mxu0 0.0
    %201 = vmatpush.msra.mxu0 0.0
    %202 = vmatpush.msra.mxu0 %v186
    %203 = vmatpush.msra.mxu0 %v185
    %204 = vmatpush.msra.mxu0 %v184
    %205 = vmatpush.msra.mxu0 %v183
    %206 = vmatpush.msra.mxu0 %v182
    %207 = vmatpush.msra.mxu0 %v181
    %208 = vmatpush.msra.mxu0 %v180
    %209 = vmatpush.msra.mxu0 %v179
    %210 = vmatmul.f32.gmra.mxu0 %v192
    %v211 = vpop.f32.mrf.mxu0
    %v212 = vadd.f32 %v189, %v211
    %213 = vdwg.mxu0
    %v214 = vmax.f32 %v212, 0.0
    %v215 = vsel %vm159, %v214, -inf
    %216 = vmax.xlane.f32.xlu0 %v215
    %v217 = vpop.xlane.xlu0 %216
    %v218 = vadd.f32 %v162, %v217
    %v219 = vmul.f32 %v214, %v214
    %v220 = vsel %vm159, %v219, 0.0
    %221 = vadd.xlane.f32.xlu0 %v220
    %v222 = vpop.xlane.xlu0 %221
    %v223 = vmax.f32 %v222, 1e-24
    %v224 = vrsqrt.pop %v223
    %v225 = vmul.f32 %v224, %v223
    %v226 = vmul.f32 %v225, %v224
    %v227 = vmul.f32 0.5, %v226
    %v228 = vsub.f32 1.5, %v227
    %v229 = vmul.f32 %v224, %v228
    %vm230 = vweird.f32 %v223
    %vm231 = vweird.f32 %v224
    %vm232 = vmor %vm230, %vm231
    %v233 = vsel %vm232, %v224, %v229
    %v234 = vmul.f32 %v214, %v233
    %v235 = vld [vmem:[#allocation8] sm:$0xff]
    %v236 = vld [vmem:[#allocation8 + $0x8] sm:$0xff]
    %v237 = vld [vmem:[#allocation8 + $0x10] sm:$0xff]
    %v238 = vld [vmem:[#allocation8 + $0x18] sm:$0xff]
    %v239 = vld [vmem:[#allocation8 + $0x20] sm:$0xff]
    %v240 = vld [vmem:[#allocation8 + $0x28] sm:$0xff]
    %v241 = vld [vmem:[#allocation8 + $0x30] sm:$0xff]
    %v242 = vld [vmem:[#allocation8 + $0x38] sm:$0xff]
    %v243 = vld [vmem:[%s6] sm:$0x1]
    %v245 = vperm.slane %v243, 0
    %v248 = vsel %vm159, %v234, 0
    %250 = vmatpush.msra.mxu0 0.0
    %251 = vmatpush.msra.mxu0 0.0
    %252 = vmatpush.msra.mxu0 0.0
    %253 = vmatpush.msra.mxu0 0.0
    %254 = vmatpush.msra.mxu0 0.0
    %255 = vmatpush.msra.mxu0 0.0
    %256 = vmatpush.msra.mxu0 0.0
    %257 = vmatpush.msra.mxu0 0.0
    %258 = vmatpush.msra.mxu0 %v242
    %259 = vmatpush.msra.mxu0 %v241
    %260 = vmatpush.msra.mxu0 %v240
    %261 = vmatpush.msra.mxu0 %v239
    %262 = vmatpush.msra.mxu0 %v238
    %263 = vmatpush.msra.mxu0 %v237
    %264 = vmatpush.msra.mxu0 %v236
    %265 = vmatpush.msra.mxu0 %v235
    %266 = vmatmul.f32.gmra.mxu0 %v248
    %v267 = vpop.f32.mrf.mxu0
    %v268 = vadd.f32 %v245, %v267
    %269 = vdwg.mxu0
    %v270 = vmax.f32 %v268, 0.0
    %v271 = vsel %vm159, %v270, -inf
    %272 = vmax.xlane.f32.xlu0 %v271
    %v273 = vpop.xlane.xlu0 %272
    %v274 = vadd.f32 %v218, %v273
    %v275 = vmul.f32 %v270, %v270
    %v276 = vsel %vm159, %v275, 0.0
    %277 = vadd.xlane.f32.xlu0 %v276
    %v278 = vpop.xlane.xlu0 %277
    %v279 = vmax.f32 %v278, 1e-24
    %v280 = vrsqrt.pop %v279
    %v281 = vmul.f32 %v280, %v279
    %v282 = vmul.f32 %v281, %v280
    %v283 = vmul.f32 0.5, %v282
    %v284 = vsub.f32 1.5, %v283
    %v285 = vmul.f32 %v280, %v284
    %vm286 = vweird.f32 %v279
    %vm287 = vweird.f32 %v280
    %vm288 = vmor %vm286, %vm287
    %v289 = vsel %vm288, %v280, %v285
    %v290 = vmul.f32 %v270, %v289
    %v291 = vld [vmem:[#allocation10] sm:$0xff]
    %v292 = vld [vmem:[#allocation10 + $0x8] sm:$0xff]
    %v293 = vld [vmem:[#allocation10 + $0x10] sm:$0xff]
    %v294 = vld [vmem:[#allocation10 + $0x18] sm:$0xff]
    %v295 = vld [vmem:[#allocation10 + $0x20] sm:$0xff]
    %v296 = vld [vmem:[#allocation10 + $0x28] sm:$0xff]
    %v297 = vld [vmem:[#allocation10 + $0x30] sm:$0xff]
    %v298 = vld [vmem:[#allocation10 + $0x38] sm:$0xff]
    %v299 = vld [vmem:[%s8] sm:$0x1]
    %v301 = vperm.slane %v299, 0
    %v304 = vsel %vm159, %v290, 0
    %306 = vmatpush.msra.mxu0 0.0
    %307 = vmatpush.msra.mxu0 0.0
    %308 = vmatpush.msra.mxu0 0.0
    %309 = vmatpush.msra.mxu0 0.0
    %310 = vmatpush.msra.mxu0 0.0
    %311 = vmatpush.msra.mxu0 0.0
    %312 = vmatpush.msra.mxu0 0.0
    %313 = vmatpush.msra.mxu0 0.0
    %314 = vmatpush.msra.mxu0 %v298
    %315 = vmatpush.msra.mxu0 %v297
    %316 = vmatpush.msra.mxu0 %v296
    %317 = vmatpush.msra.mxu0 %v295
    %318 = vmatpush.msra.mxu0 %v294
    %319 = vmatpush.msra.mxu0 %v293
    %320 = vmatpush.msra.mxu0 %v292
    %321 = vmatpush.msra.mxu0 %v291
    %322 = vmatmul.f32.gmra.mxu0 %v304
    %v323 = vpop.f32.mrf.mxu0
    %v324 = vadd.f32 %v301, %v323
    %325 = vdwg.mxu0
    %v326 = vmax.f32 %v324, 0.0
    %v327 = vsel %vm159, %v326, -inf
    %328 = vmax.xlane.f32.xlu0 %v327
    %v329 = vpop.xlane.xlu0 %328
    %v330 = vadd.f32 %v274, %v329
    %331 = vxpose.xlu0.b32.start [1/16] %v330, 128
    %332 = vxpose.xlu0.b32.cont [2/16] 0.0, 128
    %333 = vxpose.xlu0.b32.cont [3/16] 0.0, 128
    %334 = vxpose.xlu0.b32.cont [4/16] 0.0, 128
    %335 = vxpose.xlu0.b32.cont [5/16] 0.0, 128
    %336 = vxpose.xlu0.b32.cont [6/16] 0.0, 128
    %337 = vxpose.xlu0.b32.cont [7/16] 0.0, 128
    %338 = vxpose.xlu0.b32.cont [8/16] 0.0, 128
    %339 = vxpose.xlu0.b32.cont [9/16] 0.0, 128
    %340 = vxpose.xlu0.b32.cont [10/16] 0.0, 128
    %341 = vxpose.xlu0.b32.cont [11/16] 0.0, 128
    %342 = vxpose.xlu0.b32.cont [12/16] 0.0, 128
    %343 = vxpose.xlu0.b32.cont [13/16] 0.0, 128
    %344 = vxpose.xlu0.b32.cont [14/16] 0.0, 128
    %345 = vxpose.xlu0.b32.cont [15/16] 0.0, 128
    %346 = vxpose.xlu0.b32.end [16/16] 0.0, 128
    %v347 = vpop.trf.xlu0
    %v348 = vpop.trf.xlu0
    %v349 = vpop.trf.xlu0
    %v350 = vpop.trf.xlu0
    %v351 = vpop.trf.xlu0
    %v352 = vpop.trf.xlu0
    %v353 = vpop.trf.xlu0
    %v354 = vpop.trf.xlu0
    %v355 = vpop.trf.xlu0
    %v356 = vpop.trf.xlu0
    %v357 = vpop.trf.xlu0
    %v358 = vpop.trf.xlu0
    %v359 = vpop.trf.xlu0
    %v360 = vpop.trf.xlu0
    %v361 = vpop.trf.xlu0
    %v362 = vpop.trf.xlu0
    %vm363 = vcmask 57344
    %364 = vst.msk [vmem:[#allocation11] sm:$0x1] %vm363, %v347
    // Predicated region
    $region58: #{tpu_custom_call.1} parent=1 // pred_check
      _
    $region59: #{tpu_custom_call.1} parent=1 // pred_check_branch
      %366 = sbr.rel (0) target = $region61
    $region60: #{tpu_custom_call.1} parent=1 // pred_region
      %368 = vsyncadd [#allocation4], 0
      %s370 = sshll.u32 [#allocation11], 4
      %s371 = int_to_ptr.vmem [resolvable:$true] %s370
      %s372 = sshll.u32 %s9, 4
      %s373 = int_to_ptr.hbm [resolvable:$true] %s372
      %375 = dma.vmem_to_hbm [thread:$0]  %s371, 16, %s373, [#allocation4]
    $region61: #{tpu_custom_call.1} parent=1 // pred_fallthru
      _
    // Predicated region
    $region62: #{tpu_custom_call.1} parent=1 // pred_check
      _
    $region63: #{tpu_custom_call.1} parent=1 // pred_check_branch
      %377 = sbr.rel (0) target = $region65
    $region64: #{tpu_custom_call.1} parent=1 // pred_region
      %379 = dma.done [#allocation4], 16
    $region65: #{tpu_custom_call.1} parent=1 // pred_fallthru
      _
    %380 = vsyncpa [#allocation3], 1
    %381 = vsyncpa [#allocation6], 1
    %382 = vsyncpa [#allocation9], 1
    %383 = vsyncpa [#allocation4], 1

</llo_original>
